<compile_context>
chip_gen: v6e
topology: v6e:2x2x1
jax: 0.10.0
libtpu: 0.0.40
codegen_flags: <defaults>
</compile_context>

<pallas_src>
import jax
import jax.numpy as jnp
from jax.experimental import pallas as pl
from jax.experimental.pallas import tpu as pltpu

VMEM_SPEC = pl.BlockSpec(memory_space=pltpu.MemorySpace.VMEM)

# Model dimensions (from the PyTorch spec).
NODE_DIM = 20        # drug node features (lanes 0-19 of the 32-lane slab)
EDGE_DIM = 5         # drug edge features (lanes 20-24 of the 32-lane slab)
FEAT = 32            # 32-lane slab width for the merged concat(x, e) space
HIDDEN = 128         # MPNN fc1 output
DRUG_DIM = 256       # MPNN fc2 output
CNN_IN = 21          # target channels
NK = 64              # conv kernels
K = 5                # conv kernel size
CK = CNN_IN * K      # 105 = im2col patch width
TARG_DIM = 128       # CNN fc output
LANE = 128           # lane width for weights / output


# ------------------------------ Fused kernel ---------------------------------

def _dti_fused_kernel(src_ref, dst_ref, batch_ref, invc_ref, x_ref, ea_ref, xu_ref,
                      w1_ref, b1_ref, w2_ref, b2_ref,
                      wc_ref, bc_ref, wf_ref, bf_ref,
                      wd_ref, wt_ref, bh_ref, out_ref):
    f32, bf16 = jnp.float32, jnp.bfloat16
    E = src_ref.shape[1]
    N = x_ref.shape[0]
    R = out_ref.shape[0]                 # sublane-aligned graph/target row count

    # One-hot masks built in-kernel from lane-major index rows (nothing dense
    # in HBM, no (E,1) layouts).  0/1 masks are exact in bf16.
    scat = (jax.lax.broadcasted_iota(jnp.int32, (N, E), 0)
            == dst_ref[...]).astype(bf16)                               # (N, E)
    gathT = (jax.lax.broadcasted_iota(jnp.int32, (N, E), 0)
             == src_ref[...]).astype(bf16)                              # (N, E)
    pmat = (jax.lax.broadcasted_iota(jnp.int32, (R, N), 0)
            == batch_ref[...]).astype(bf16)                             # (R, N)

    # ----------------------- MPNN drug encoder --------------------------------
    # adjacency counts A[v,u] = #edges u->v  (NT matmul; small ints, bf16-exact)
    adj = jax.lax.dot_general(scat, gathT, (((1,), (1,)), ((), ())),
                              preferred_element_type=f32).astype(bf16)  # (N, N)
    # aggregated concat(x[src], edge_attr): node part in lanes 0-19, edge part
    # in lanes 20-24 of the 32-lane slab.
    agg = (jnp.dot(adj, x_ref[...], preferred_element_type=f32)
           + jnp.dot(scat, ea_ref[...], preferred_element_type=f32))    # (N, 32)
    # single merged fc1 (applied once per node, after aggregation) + ReLU
    h = jnp.maximum(jnp.dot(agg.astype(bf16), w1_ref[...],
                            preferred_element_type=f32) + b1_ref[...], 0.0)   # (N, 128)
    h2 = (jnp.dot(h.astype(bf16), w2_ref[...], preferred_element_type=f32)
          + b2_ref[...])                                                 # (N, 256)
    # global mean pool: one-hot pool matmul, normalization via wrapper-computed
    # reciprocal counts (no in-kernel reduce/divide).
    drug = jnp.dot(pmat, h2.astype(bf16),
                   preferred_element_type=f32) * invc_ref[...]           # (R, 256)

    # ----------------------- CNN target encoder -------------------------------
    # One matmul over both conv positions; ReLU; MaxPool1d(2) as a VPU max over
    # sublane-aligned row groups; then fc.
    y = jnp.maximum(jnp.dot(xu_ref[...], wc_ref[...],
                            preferred_element_type=f32) + bc_ref[...], 0.0)   # (2R, 128)
    pooled = jnp.maximum(y[:R], y[R:])                                   # (R, 128)
    targ = (jnp.dot(pooled.astype(bf16), wf_ref[...],
                    preferred_element_type=f32) + bf_ref[...])           # (R, 128)

    # ------------------------------- Head --------------------------------------
    logit = (jnp.dot(drug.astype(bf16), wd_ref[...], preferred_element_type=f32)
             + jnp.dot(targ.astype(bf16), wt_ref[...], preferred_element_type=f32)
             + bh_ref[...])                                              # (R, 128)
    out_ref[...] = jax.nn.sigmoid(logit)


# ------------------------------- Wrapper --------------------------------------

def dti_model(drug_x, edge_index, edge_attr, batch, target, params):
    N = drug_x.shape[0]
    E = edge_index.shape[1]
    B, C, L = target.shape
    G = B                                   # one graph per target row
    P = L - K + 1                           # conv output length
    assert P == 2, "Linear(64,128) head requires pooled length 1, i.e. L == 6"
    # TODO(synk): general L needs in-kernel pl.ds windows instead of im2col.
    Rp = ((B + 7) // 8) * 8                 # sublane-aligned row count

    # Lane-major int32 index rows (no (E,1) layouts -> no 128x VMEM inflation).
    src = edge_index[0].astype(jnp.int32).reshape(1, E)
    dst = edge_index[1].astype(jnp.int32).reshape(1, E)
    batch_row = batch.astype(jnp.int32).reshape(1, N)

    # Per-graph reciprocal node counts (mean-pool normalization folded out).
    counts = jnp.zeros((Rp,), jnp.float32).at[batch].add(1.0)
    invc = (1.0 / jnp.maximum(counts, 1.0)).reshape(Rp, 1)

    # 32-lane bf16 slabs: node feats at lanes 0-19, edge feats at lanes 20-24.
    x_in = jnp.zeros((N, FEAT), jnp.bfloat16).at[:, :NODE_DIM].set(
        drug_x.astype(jnp.bfloat16))
    ea_in = jnp.zeros((E, FEAT), jnp.bfloat16).at[:, NODE_DIM:NODE_DIM + EDGE_DIM].set(
        edge_attr.astype(jnp.bfloat16))

    # Conv im2col patches (cheap XLA glue), one Rp-aligned row group per conv
    # position, unpadded 105-wide lanes.
    xu = jnp.zeros((2 * Rp, CK), jnp.bfloat16)
    for p in range(P):
        patch = target[:, :, p:p + K].reshape(B, CK).astype(jnp.bfloat16)
        xu = xu.at[p * Rp:p * Rp + B].set(patch)

    out = pl.pallas_call(
        _dti_fused_kernel,
        out_shape=jax.ShapeDtypeStruct((Rp, LANE), jnp.float32),
        in_specs=[VMEM_SPEC] * 18,
        out_specs=VMEM_SPEC,
    )(src, dst, batch_row, invc, x_in, ea_in, xu,
      params["mpnn_w1"], params["mpnn_b1"], params["mpnn_w2"], params["mpnn_b2"],
      params["conv_w"], params["conv_b"], params["cnn_fc_w"], params["cnn_fc_b"],
      params["head_wd"], params["head_wt"], params["head_b"])

    return out[:G, :1]                      # logit lives in lane 0


# ------------------------------ Param init ------------------------------------

def _linear_init(key, fan_in, fan_out):
    bound = 1.0 / float(fan_in) ** 0.5
    kw, kb = jax.random.split(key)
    w = jax.random.uniform(kw, (fan_in, fan_out), jnp.float32, -bound, bound)
    b = jax.random.uniform(kb, (1, fan_out), jnp.float32, -bound, bound)
    return w, b


def init_params(key):
    ks = jax.random.split(key, 5)
    p = {}

    # MPNN fc1: Linear(25 -> 128) as ONE bf16 weight; rows 0-19 node part,
    # rows 20-24 edge part, rows 25-31 zero (matches the 32-lane slab layout).
    w1, b1 = _linear_init(ks[0], NODE_DIM + EDGE_DIM, HIDDEN)
    p["mpnn_w1"] = jnp.zeros((FEAT, HIDDEN), jnp.float32).at[
        :NODE_DIM + EDGE_DIM].set(w1).astype(jnp.bfloat16)
    p["mpnn_b1"] = b1

    # MPNN fc2: Linear(128 -> 256).
    w2, b2 = _linear_init(ks[1], HIDDEN, DRUG_DIM)
    p["mpnn_w2"] = w2.astype(jnp.bfloat16)
    p["mpnn_b2"] = b2

    # CNN Conv1d(21 -> 64, k=5) as a (105 -> 64) linear, output lanes padded to
    # 128 (weight flattened with index c*K + k, matching the patch layout).
    wc, bc = _linear_init(ks[2], CK, NK)
    p["conv_w"] = jnp.zeros((CK, LANE), jnp.float32).at[:, :NK].set(wc).astype(jnp.bfloat16)
    p["conv_b"] = jnp.zeros((1, LANE), jnp.float32).at[:, :NK].set(bc)

    # CNN fc: Linear(64 -> 128); contraction rows zero-padded to 128.
    wf, bf = _linear_init(ks[3], NK, TARG_DIM)
    p["cnn_fc_w"] = jnp.zeros((LANE, TARG_DIM), jnp.float32).at[:NK].set(wf).astype(jnp.bfloat16)
    p["cnn_fc_b"] = bf

    # Head: Linear(384 -> 1), split into drug (256) / target (128) halves,
    # output column zero-padded to 128 lanes (logit is column 0).
    wh, bh = _linear_init(ks[4], DRUG_DIM + TARG_DIM, 1)
    p["head_wd"] = jnp.zeros((DRUG_DIM, LANE), jnp.float32).at[:, :1].set(
        wh[:DRUG_DIM]).astype(jnp.bfloat16)
    p["head_wt"] = jnp.zeros((TARG_DIM, LANE), jnp.float32).at[:, :1].set(
        wh[DRUG_DIM:]).astype(jnp.bfloat16)
    p["head_b"] = jnp.zeros((1, LANE), jnp.float32).at[:, :1].set(bh)
    return p


# --------------------------------- Main ----------------------------------------

if __name__ == "__main__":
    key = jax.random.PRNGKey(0)
    kp, kx, ke, kt, ks0, ks1 = jax.random.split(key, 6)

    params = init_params(kp)

    # drug graph: 2 graphs, 4 nodes each, 8 intra-graph edges per graph
    n_nodes, n_edges_per_graph = 8, 8
    drug_x = jax.random.normal(kx, (n_nodes, 20), jnp.float32)
    edge_attr = jax.random.normal(ke, (2 * n_edges_per_graph, 5), jnp.float32)
    e0 = jax.random.randint(ks0, (2, n_edges_per_graph), 0, 4)   # graph 0 nodes 0-3
    e1 = jax.random.randint(ks1, (2, n_edges_per_graph), 4, 8)   # graph 1 nodes 4-7
    edge_index = jnp.concatenate([e0, e1], axis=1)               # (2, 16)
    batch = jnp.array([0, 0, 0, 0, 1, 1, 1, 1], dtype=jnp.int32)

    # target sequence: (B=2, C=21, L=6) -> conv len 2 -> maxpool len 1 -> flatten 64
    target_data = jax.random.normal(kt, (2, 21, 6), jnp.float32)

    dti = jax.jit(dti_model)
    out = dti(drug_x, edge_index, edge_attr, batch, target_data, params)
    out = jax.block_until_ready(out)
    assert out.shape == (2, 1)
    assert bool(jnp.all((out >= 0.0) & (out <= 1.0)))
    print("KERNEL_OK")
</pallas_src>

<mosaic_0001>
module attributes {stable_mosaic.version = 11 : i64} {
  func.func private @main(%arg0: i32) attributes {dimension_semantics = [#tpu.dimension_semantics<core_parallel>], iteration_bounds = array<i64: 2>, tpu.core_type = #tpu.core_type<sc_scalar_subcore>, window_params = []} {
    return
  }
}

module attributes {stable_mosaic.version = 11 : i64} {
  func.func private @main(%arg0: i32) attributes {dimension_semantics = [#tpu.dimension_semantics<core_parallel>], iteration_bounds = array<i64: 2>, tpu.core_type = #tpu.core_type<sc_scalar_subcore>, window_params = []} {
    return
  }
}

module attributes {stable_mosaic.version = 11 : i64} {
  func.func @_dti_fused_kernel(%arg0: memref<1x16xi32, #tpu.memory_space<vmem>>, %arg1: memref<1x16xi32, #tpu.memory_space<vmem>>, %arg2: memref<1x8xi32, #tpu.memory_space<vmem>>, %arg3: memref<8x1xf32, #tpu.memory_space<vmem>>, %arg4: memref<8x32xbf16, #tpu.memory_space<vmem>>, %arg5: memref<16x32xbf16, #tpu.memory_space<vmem>>, %arg6: memref<16x105xbf16, #tpu.memory_space<vmem>>, %arg7: memref<32x128xbf16, #tpu.memory_space<vmem>>, %arg8: memref<1x128xf32, #tpu.memory_space<vmem>>, %arg9: memref<128x256xbf16, #tpu.memory_space<vmem>>, %arg10: memref<1x256xf32, #tpu.memory_space<vmem>>, %arg11: memref<105x128xbf16, #tpu.memory_space<vmem>>, %arg12: memref<1x128xf32, #tpu.memory_space<vmem>>, %arg13: memref<128x128xbf16, #tpu.memory_space<vmem>>, %arg14: memref<1x128xf32, #tpu.memory_space<vmem>>, %arg15: memref<256x128xbf16, #tpu.memory_space<vmem>>, %arg16: memref<128x128xbf16, #tpu.memory_space<vmem>>, %arg17: memref<1x128xf32, #tpu.memory_space<vmem>>, %arg18: memref<8x128xf32, #tpu.memory_space<vmem>>) attributes {dimension_semantics = [], scalar_prefetch = 0 : i64, scratch_operands = 0 : i64, tpu.core_type = #tpu.core_type<tc>} {
    %0 = tpu.iota {dimensions = array<i32: 0>} : vector<8x16xi32>
    %c0 = arith.constant 0 : index
    %c0_0 = arith.constant 0 : index
    %1 = vector.load %arg1[%c0, %c0_0] : memref<1x16xi32, #tpu.memory_space<vmem>>, vector<1x16xi32>
    %2 = vector.broadcast %1 : vector<1x16xi32> to vector<8x16xi32>
    %3 = arith.cmpi eq, %0, %2 : vector<8x16xi32>
    %4 = arith.extui %3 : vector<8x16xi1> to vector<8x16xi32>
    %5 = arith.sitofp %4 : vector<8x16xi32> to vector<8x16xf32>
    %6 = arith.truncf %5 : vector<8x16xf32> to vector<8x16xbf16>
    %7 = tpu.iota {dimensions = array<i32: 0>} : vector<8x16xi32>
    %c0_1 = arith.constant 0 : index
    %c0_2 = arith.constant 0 : index
    %8 = vector.load %arg0[%c0_1, %c0_2] : memref<1x16xi32, #tpu.memory_space<vmem>>, vector<1x16xi32>
    %9 = vector.broadcast %8 : vector<1x16xi32> to vector<8x16xi32>
    %10 = arith.cmpi eq, %7, %9 : vector<8x16xi32>
    %11 = arith.extui %10 : vector<8x16xi1> to vector<8x16xi32>
    %12 = arith.sitofp %11 : vector<8x16xi32> to vector<8x16xf32>
    %13 = arith.truncf %12 : vector<8x16xf32> to vector<8x16xbf16>
    %14 = tpu.iota {dimensions = array<i32: 0>} : vector<8x8xi32>
    %c0_3 = arith.constant 0 : index
    %c0_4 = arith.constant 0 : index
    %15 = vector.load %arg2[%c0_3, %c0_4] : memref<1x8xi32, #tpu.memory_space<vmem>>, vector<1x8xi32>
    %16 = vector.broadcast %15 : vector<1x8xi32> to vector<8x8xi32>
    %17 = arith.cmpi eq, %14, %16 : vector<8x8xi32>
    %18 = arith.extui %17 : vector<8x8xi1> to vector<8x8xi32>
    %19 = arith.sitofp %18 : vector<8x8xi32> to vector<8x8xf32>
    %20 = arith.truncf %19 : vector<8x8xf32> to vector<8x8xbf16>
    %cst = arith.constant dense<0.000000e+00> : vector<8x8xf32>
    %21 = tpu.matmul %6, %13, %cst {dimension_numbers = #tpu.dot_dimension_numbers<[1], [1], [0], [0], [0, 0, 1, 0], [], []>} : vector<8x16xbf16>, vector<8x16xbf16>, vector<8x8xf32> -> vector<8x8xf32>
    %22 = arith.truncf %21 : vector<8x8xf32> to vector<8x8xbf16>
    %c0_5 = arith.constant 0 : index
    %c0_6 = arith.constant 0 : index
    %23 = vector.load %arg4[%c0_5, %c0_6] : memref<8x32xbf16, #tpu.memory_space<vmem>>, vector<8x32xbf16>
    %cst_7 = arith.constant dense<0.000000e+00> : vector<8x32xf32>
    %24 = tpu.matmul %22, %23, %cst_7 {dimension_numbers = #tpu.dot_dimension_numbers<[1], [0], [0], [1], [0, 0, 1, 1], [], []>} : vector<8x8xbf16>, vector<8x32xbf16>, vector<8x32xf32> -> vector<8x32xf32>
    %c0_8 = arith.constant 0 : index
    %c0_9 = arith.constant 0 : index
    %25 = vector.load %arg5[%c0_8, %c0_9] : memref<16x32xbf16, #tpu.memory_space<vmem>>, vector<16x32xbf16>
    %cst_10 = arith.constant dense<0.000000e+00> : vector<8x32xf32>
    %26 = tpu.matmul %6, %25, %cst_10 {dimension_numbers = #tpu.dot_dimension_numbers<[1], [0], [0], [1], [0, 0, 1, 1], [], []>} : vector<8x16xbf16>, vector<16x32xbf16>, vector<8x32xf32> -> vector<8x32xf32>
    %27 = arith.addf %24, %26 : vector<8x32xf32>
    %28 = arith.truncf %27 : vector<8x32xf32> to vector<8x32xbf16>
    %c0_11 = arith.constant 0 : index
    %c0_12 = arith.constant 0 : index
    %29 = vector.load %arg7[%c0_11, %c0_12] : memref<32x128xbf16, #tpu.memory_space<vmem>>, vector<32x128xbf16>
    %cst_13 = arith.constant dense<0.000000e+00> : vector<8x128xf32>
    %30 = tpu.matmul %28, %29, %cst_13 {dimension_numbers = #tpu.dot_dimension_numbers<[1], [0], [0], [1], [0, 0, 1, 1], [], []>} : vector<8x32xbf16>, vector<32x128xbf16>, vector<8x128xf32> -> vector<8x128xf32>
    %c0_14 = arith.constant 0 : index
    %c0_15 = arith.constant 0 : index
    %31 = vector.load %arg8[%c0_14, %c0_15] : memref<1x128xf32, #tpu.memory_space<vmem>>, vector<1x128xf32>
    %32 = vector.broadcast %31 : vector<1x128xf32> to vector<8x128xf32>
    %33 = arith.addf %30, %32 : vector<8x128xf32>
    %cst_16 = arith.constant 0.000000e+00 : f32
    %34 = vector.broadcast %cst_16 : f32 to vector<8x128xf32>
    %35 = arith.maximumf %33, %34 : vector<8x128xf32>
    %36 = arith.truncf %35 : vector<8x128xf32> to vector<8x128xbf16>
    %c0_17 = arith.constant 0 : index
    %c0_18 = arith.constant 0 : index
    %37 = vector.load %arg9[%c0_17, %c0_18] : memref<128x256xbf16, #tpu.memory_space<vmem>>, vector<128x256xbf16>
    %cst_19 = arith.constant dense<0.000000e+00> : vector<8x256xf32>
    %38 = tpu.matmul %36, %37, %cst_19 {dimension_numbers = #tpu.dot_dimension_numbers<[1], [0], [0], [1], [0, 0, 1, 1], [], []>} : vector<8x128xbf16>, vector<128x256xbf16>, vector<8x256xf32> -> vector<8x256xf32>
    %c0_20 = arith.constant 0 : index
    %c0_21 = arith.constant 0 : index
    %39 = vector.load %arg10[%c0_20, %c0_21] : memref<1x256xf32, #tpu.memory_space<vmem>>, vector<1x256xf32>
    %40 = vector.broadcast %39 : vector<1x256xf32> to vector<8x256xf32>
    %41 = arith.addf %38, %40 : vector<8x256xf32>
    %42 = arith.truncf %41 : vector<8x256xf32> to vector<8x256xbf16>
    %cst_22 = arith.constant dense<0.000000e+00> : vector<8x256xf32>
    %43 = tpu.matmul %20, %42, %cst_22 {dimension_numbers = #tpu.dot_dimension_numbers<[1], [0], [0], [1], [0, 0, 1, 1], [], []>} : vector<8x8xbf16>, vector<8x256xbf16>, vector<8x256xf32> -> vector<8x256xf32>
    %c0_23 = arith.constant 0 : index
    %c0_24 = arith.constant 0 : index
    %44 = vector.load %arg3[%c0_23, %c0_24] : memref<8x1xf32, #tpu.memory_space<vmem>>, vector<8x1xf32>
    %45 = vector.broadcast %44 : vector<8x1xf32> to vector<8x256xf32>
    %46 = arith.mulf %43, %45 : vector<8x256xf32>
    %c0_25 = arith.constant 0 : index
    %c0_26 = arith.constant 0 : index
    %47 = vector.load %arg6[%c0_25, %c0_26] : memref<16x105xbf16, #tpu.memory_space<vmem>>, vector<16x105xbf16>
    %c0_27 = arith.constant 0 : index
    %c0_28 = arith.constant 0 : index
    %48 = vector.load %arg11[%c0_27, %c0_28] : memref<105x128xbf16, #tpu.memory_space<vmem>>, vector<105x128xbf16>
    %cst_29 = arith.constant dense<0.000000e+00> : vector<16x128xf32>
    %49 = tpu.matmul %47, %48, %cst_29 {dimension_numbers = #tpu.dot_dimension_numbers<[1], [0], [0], [1], [0, 0, 1, 1], [], []>} : vector<16x105xbf16>, vector<105x128xbf16>, vector<16x128xf32> -> vector<16x128xf32>
    %c0_30 = arith.constant 0 : index
    %c0_31 = arith.constant 0 : index
    %50 = vector.load %arg12[%c0_30, %c0_31] : memref<1x128xf32, #tpu.memory_space<vmem>>, vector<1x128xf32>
    %51 = vector.broadcast %50 : vector<1x128xf32> to vector<16x128xf32>
    %52 = arith.addf %49, %51 : vector<16x128xf32>
    %cst_32 = arith.constant 0.000000e+00 : f32
    %53 = vector.broadcast %cst_32 : f32 to vector<16x128xf32>
    %54 = arith.maximumf %52, %53 : vector<16x128xf32>
    %55 = vector.extract_strided_slice %54 {offsets = [0, 0], sizes = [8, 128], strides = [1, 1]} : vector<16x128xf32> to vector<8x128xf32>
    %56 = vector.extract_strided_slice %54 {offsets = [8, 0], sizes = [8, 128], strides = [1, 1]} : vector<16x128xf32> to vector<8x128xf32>
    %57 = arith.maximumf %55, %56 : vector<8x128xf32>
    %58 = arith.truncf %57 : vector<8x128xf32> to vector<8x128xbf16>
    %c0_33 = arith.constant 0 : index
    %c0_34 = arith.constant 0 : index
    %59 = vector.load %arg13[%c0_33, %c0_34] : memref<128x128xbf16, #tpu.memory_space<vmem>>, vector<128x128xbf16>
    %cst_35 = arith.constant dense<0.000000e+00> : vector<8x128xf32>
    %60 = tpu.matmul %58, %59, %cst_35 {dimension_numbers = #tpu.dot_dimension_numbers<[1], [0], [0], [1], [0, 0, 1, 1], [], []>} : vector<8x128xbf16>, vector<128x128xbf16>, vector<8x128xf32> -> vector<8x128xf32>
    %c0_36 = arith.constant 0 : index
    %c0_37 = arith.constant 0 : index
    %61 = vector.load %arg14[%c0_36, %c0_37] : memref<1x128xf32, #tpu.memory_space<vmem>>, vector<1x128xf32>
    %62 = vector.broadcast %61 : vector<1x128xf32> to vector<8x128xf32>
    %63 = arith.addf %60, %62 : vector<8x128xf32>
    %64 = arith.truncf %46 : vector<8x256xf32> to vector<8x256xbf16>
    %c0_38 = arith.constant 0 : index
    %c0_39 = arith.constant 0 : index
    %65 = vector.load %arg15[%c0_38, %c0_39] : memref<256x128xbf16, #tpu.memory_space<vmem>>, vector<256x128xbf16>
    %cst_40 = arith.constant dense<0.000000e+00> : vector<8x128xf32>
    %66 = tpu.matmul %64, %65, %cst_40 {dimension_numbers = #tpu.dot_dimension_numbers<[1], [0], [0], [1], [0, 0, 1, 1], [], []>} : vector<8x256xbf16>, vector<256x128xbf16>, vector<8x128xf32> -> vector<8x128xf32>
    %67 = arith.truncf %63 : vector<8x128xf32> to vector<8x128xbf16>
    %c0_41 = arith.constant 0 : index
    %c0_42 = arith.constant 0 : index
    %68 = vector.load %arg16[%c0_41, %c0_42] : memref<128x128xbf16, #tpu.memory_space<vmem>>, vector<128x128xbf16>
    %cst_43 = arith.constant dense<0.000000e+00> : vector<8x128xf32>
    %69 = tpu.matmul %67, %68, %cst_43 {dimension_numbers = #tpu.dot_dimension_numbers<[1], [0], [0], [1], [0, 0, 1, 1], [], []>} : vector<8x128xbf16>, vector<128x128xbf16>, vector<8x128xf32> -> vector<8x128xf32>
    %70 = arith.addf %66, %69 : vector<8x128xf32>
    %c0_44 = arith.constant 0 : index
    %c0_45 = arith.constant 0 : index
    %71 = vector.load %arg17[%c0_44, %c0_45] : memref<1x128xf32, #tpu.memory_space<vmem>>, vector<1x128xf32>
    %72 = vector.broadcast %71 : vector<1x128xf32> to vector<8x128xf32>
    %73 = arith.addf %70, %72 : vector<8x128xf32>
    %74 = arith.negf %73 : vector<8x128xf32>
    %75 = math.exp %74 : vector<8x128xf32>
    %cst_46 = arith.constant 1.000000e+00 : f32
    %76 = vector.broadcast %cst_46 : f32 to vector<8x128xf32>
    %77 = arith.addf %76, %75 : vector<8x128xf32>
    %78 = arith.divf %76, %77 : vector<8x128xf32>
    %c0_47 = arith.constant 0 : index
    %c0_48 = arith.constant 0 : index
    %79 = vector.load %arg18[%c0_47, %c0_48] : memref<8x128xf32, #tpu.memory_space<vmem>>, vector<8x128xf32>
    tpu.vector_store %arg18[%c0_47, %c0_48], %78 {strides = array<i32>} : memref<8x128xf32, #tpu.memory_space<vmem>>, vector<8x128xf32>,
    return
  }
}

</mosaic_0001>

<llo_original>
// kernel: dti_model.1
$region0: #{dti_model.1}
  #allocation0 [shape = 'u32[]', space=smem, size = 0x4, offset = 0x4, fixed_abs, tag = 'smem constant byte address 0x4 - core index']
  #allocation1 [shape = 'u32[144,128]{1,0:T(1,128)}', space=vmem, size = 0x12000, scoped, tag = 'internal scratch']
  %s0 = inlined_call_operand.vmem [shape: s32[1,16], index: 0, kind: input, shape index: {}]
  %s1 = inlined_call_operand.vmem [shape: s32[1,16], index: 1, kind: input, shape index: {}]
  %s2 = inlined_call_operand.vmem [shape: s32[1,8], index: 2, kind: input, shape index: {}]
  %s3 = inlined_call_operand.vmem [shape: f32[8,1], index: 3, kind: input, shape index: {}]
  %s4 = inlined_call_operand.vmem [shape: bf16[8,32], index: 4, kind: input, shape index: {}]
  %s5 = inlined_call_operand.vmem [shape: bf16[16,32], index: 5, kind: input, shape index: {}]
  %s6 = inlined_call_operand.vmem [shape: bf16[16,105], index: 6, kind: input, shape index: {}]
  %s7 = inlined_call_operand.vmem [shape: bf16[32,128], index: 7, kind: input, shape index: {}]
  %s8 = inlined_call_operand.vmem [shape: f32[1,128], index: 8, kind: input, shape index: {}]
  %s9 = inlined_call_operand.vmem [shape: bf16[128,256], index: 9, kind: input, shape index: {}]
  %s10 = inlined_call_operand.vmem [shape: f32[1,256], index: 10, kind: input, shape index: {}]
  %s11 = inlined_call_operand.vmem [shape: bf16[105,128], index: 11, kind: input, shape index: {}]
  %s12 = inlined_call_operand.vmem [shape: f32[1,128], index: 12, kind: input, shape index: {}]
  %s13 = inlined_call_operand.vmem [shape: bf16[128,128], index: 13, kind: input, shape index: {}]
  %s14 = inlined_call_operand.vmem [shape: f32[1,128], index: 14, kind: input, shape index: {}]
  %s15 = inlined_call_operand.vmem [shape: bf16[256,128], index: 15, kind: input, shape index: {}]
  %s16 = inlined_call_operand.vmem [shape: bf16[128,128], index: 16, kind: input, shape index: {}]
  %s17 = inlined_call_operand.vmem [shape: f32[1,128], index: 17, kind: input, shape index: {}]
  %s18 = inlined_call_operand.vmem [shape: f32[8,128], index: 18, kind: output, shape index: {}]
  %s19 = sld [smem:[#allocation0]]
  $region82: #{dti_model.1} parent=0
    _
  %s21 = ssub.s32 1, %s19
  %s22 = scalar_select 0, %s21, %s19
  // Predicated region
  $region2: #{dti_model.1} parent=0 // pred_check
    _
  $region3: #{dti_model.1} parent=0 // pred_check_branch
    %24 = sbr.rel (0) target = $region5
  $region4: #{dti_model.1} parent=0 // pred_region
    _
  $region5: #{dti_model.1} parent=0 // pred_fallthru
    _
  // Predicated region
  $region6: #{dti_model.1} parent=0 // pred_check
    _
  $region7: #{dti_model.1} parent=0 // pred_check_branch
    %26 = sbr.rel (0) target = $region9
  $region8: #{dti_model.1} parent=0 // pred_region
    _
  $region9: #{dti_model.1} parent=0 // pred_fallthru
    _
  // Predicated region
  $region10: #{dti_model.1} parent=0 // pred_check
    _
  $region11: #{dti_model.1} parent=0 // pred_check_branch
    %28 = sbr.rel (0) target = $region13
  $region12: #{dti_model.1} parent=0 // pred_region
    _
  $region13: #{dti_model.1} parent=0 // pred_fallthru
    _
  // Predicated region
  $region14: #{dti_model.1} parent=0 // pred_check
    _
  $region15: #{dti_model.1} parent=0 // pred_check_branch
    %30 = sbr.rel (0) target = $region17
  $region16: #{dti_model.1} parent=0 // pred_region
    _
  $region17: #{dti_model.1} parent=0 // pred_fallthru
    _
  // Predicated region
  $region18: #{dti_model.1} parent=0 // pred_check
    _
  $region19: #{dti_model.1} parent=0 // pred_check_branch
    %32 = sbr.rel (0) target = $region21
  $region20: #{dti_model.1} parent=0 // pred_region
    _
  $region21: #{dti_model.1} parent=0 // pred_fallthru
    _
  // Predicated region
  $region22: #{dti_model.1} parent=0 // pred_check
    _
  $region23: #{dti_model.1} parent=0 // pred_check_branch
    %34 = sbr.rel (0) target = $region25
  $region24: #{dti_model.1} parent=0 // pred_region
    _
  $region25: #{dti_model.1} parent=0 // pred_fallthru
    _
  // Predicated region
  $region26: #{dti_model.1} parent=0 // pred_check
    _
  $region27: #{dti_model.1} parent=0 // pred_check_branch
    %36 = sbr.rel (0) target = $region29
  $region28: #{dti_model.1} parent=0 // pred_region
    _
  $region29: #{dti_model.1} parent=0 // pred_fallthru
    _
  // Predicated region
  $region30: #{dti_model.1} parent=0 // pred_check
    _
  $region31: #{dti_model.1} parent=0 // pred_check_branch
    %38 = sbr.rel (0) target = $region33
  $region32: #{dti_model.1} parent=0 // pred_region
    _
  $region33: #{dti_model.1} parent=0 // pred_fallthru
    _
  // Predicated region
  $region34: #{dti_model.1} parent=0 // pred_check
    _
  $region35: #{dti_model.1} parent=0 // pred_check_branch
    %40 = sbr.rel (0) target = $region37
  $region36: #{dti_model.1} parent=0 // pred_region
    _
  $region37: #{dti_model.1} parent=0 // pred_fallthru
    _
  // Predicated region
  $region38: #{dti_model.1} parent=0 // pred_check
    _
  $region39: #{dti_model.1} parent=0 // pred_check_branch
    %42 = sbr.rel (0) target = $region41
  $region40: #{dti_model.1} parent=0 // pred_region
    _
  $region41: #{dti_model.1} parent=0 // pred_fallthru
    _
  // Predicated region
  $region42: #{dti_model.1} parent=0 // pred_check
    _
  $region43: #{dti_model.1} parent=0 // pred_check_branch
    %44 = sbr.rel (0) target = $region45
  $region44: #{dti_model.1} parent=0 // pred_region
    _
  $region45: #{dti_model.1} parent=0 // pred_fallthru
    _
  // Predicated region
  $region46: #{dti_model.1} parent=0 // pred_check
    _
  $region47: #{dti_model.1} parent=0 // pred_check_branch
    %46 = sbr.rel (0) target = $region49
  $region48: #{dti_model.1} parent=0 // pred_region
    _
  $region49: #{dti_model.1} parent=0 // pred_fallthru
    _
  // Predicated region
  $region50: #{dti_model.1} parent=0 // pred_check
    _
  $region51: #{dti_model.1} parent=0 // pred_check_branch
    %48 = sbr.rel (0) target = $region53
  $region52: #{dti_model.1} parent=0 // pred_region
    _
  $region53: #{dti_model.1} parent=0 // pred_fallthru
    _
  // Predicated region
  $region54: #{dti_model.1} parent=0 // pred_check
    _
  $region55: #{dti_model.1} parent=0 // pred_check_branch
    %50 = sbr.rel (0) target = $region57
  $region56: #{dti_model.1} parent=0 // pred_region
    _
  $region57: #{dti_model.1} parent=0 // pred_fallthru
    _
  // Predicated region
  $region58: #{dti_model.1} parent=0 // pred_check
    _
  $region59: #{dti_model.1} parent=0 // pred_check_branch
    %52 = sbr.rel (0) target = $region61
  $region60: #{dti_model.1} parent=0 // pred_region
    _
  $region61: #{dti_model.1} parent=0 // pred_fallthru
    _
  // Predicated region
  $region62: #{dti_model.1} parent=0 // pred_check
    _
  $region63: #{dti_model.1} parent=0 // pred_check_branch
    %54 = sbr.rel (0) target = $region65
  $region64: #{dti_model.1} parent=0 // pred_region
    _
  $region65: #{dti_model.1} parent=0 // pred_fallthru
    _
  // Predicated region
  $region66: #{dti_model.1} parent=0 // pred_check
    _
  $region67: #{dti_model.1} parent=0 // pred_check_branch
    %56 = sbr.rel (0) target = $region69
  $region68: #{dti_model.1} parent=0 // pred_region
    _
  $region69: #{dti_model.1} parent=0 // pred_fallthru
    _
  // Predicated region
  $region70: #{dti_model.1} parent=0 // pred_check
    _
  $region71: #{dti_model.1} parent=0 // pred_check_branch
    %58 = sbr.rel (0) target = $region73
  $region72: #{dti_model.1} parent=0 // pred_region
    _
  $region73: #{dti_model.1} parent=0 // pred_fallthru
    _
  %v60 = vlaneseq
  %v61 = vshrl.u32 %v60, 7
  %v62 = vld [vmem:[%s1] sm:$0x1]
  %v63 = vlaneseq
  %v64 = vshrl.u32 %v63, 7
  %v65 = vsub.s32 0, %v64
  %v66 = vrot.slane %v62, %v65
  %vm67 = vcmp.eq.s32.totalorder %v61, %v66
  %v68 = vsel %vm67, 1, 0
  %v69 = vcvt.s32.f32 %v68
  %v70 = vpack.c.bf16 %v69, %v69
  %v71 = vld [vmem:[%s0] sm:$0x1]
  %v72 = vlaneseq
  %v73 = vshrl.u32 %v72, 7
  %v74 = vsub.s32 0, %v73
  %v75 = vrot.slane %v71, %v74
  %vm76 = vcmp.eq.s32.totalorder %v61, %v75
  %v77 = vsel %vm76, 1, 0
  %v78 = vcvt.s32.f32 %v77
  %v79 = vpack.c.bf16 %v78, %v78
  %v80 = vld [vmem:[%s2] sm:$0x1]
  %v81 = vlaneseq
  %v82 = vshrl.u32 %v81, 7
  %v83 = vsub.s32 0, %v82
  %v84 = vrot.slane %v80, %v83
  %vm85 = vcmp.eq.s32.totalorder %v61, %v84
  %v86 = vsel %vm85, 1, 0
  %v87 = vcvt.s32.f32 %v86
  %v88 = vpack.c.bf16 %v87, %v87
  %vm89 = vcmask 130048
  %v91 = vsel %vm89, %v70, 0
  %v94 = vsel %vm89, %v79, 0
  %96 = vmatprep.subr.bf16.mxu0 0
  %97 = vmatpush1.bf16.xpose.msra.mxu0 0
  %98 = vmatprep.subr.bf16.mxu0 0
  %99 = vmatpush1.bf16.xpose.msra.mxu0 0
  %100 = vmatprep.subr.bf16.mxu0 0
  %101 = vmatpush1.bf16.xpose.msra.mxu0 0
  %102 = vmatprep.subr.bf16.mxu0 0
  %103 = vmatpush1.bf16.xpose.msra.mxu0 0
  %104 = vmatprep.subr.bf16.mxu0 0
  %105 = vmatpush1.bf16.xpose.msra.mxu0 0
  %106 = vmatprep.subr.bf16.mxu0 0
  %107 = vmatpush1.bf16.xpose.msra.mxu0 0
  %108 = vmatprep.subr.bf16.mxu0 0
  %109 = vmatpush1.bf16.xpose.msra.mxu0 0
  %110 = vmatprep.subr.bf16.mxu0 0
  %111 = vmatpush1.bf16.xpose.msra.mxu0 %v94
  %112 = vmatprep.subr.bf16.mxu0 0
  %113 = vmatpush2.bf16.xpose.msra.mxu0 0
  %114 = vmatprep.subr.bf16.mxu0 0
  %115 = vmatpush2.bf16.xpose.msra.mxu0 0
  %116 = vmatprep.subr.bf16.mxu0 0
  %117 = vmatpush2.bf16.xpose.msra.mxu0 0
  %118 = vmatprep.subr.bf16.mxu0 0
  %119 = vmatpush2.bf16.xpose.msra.mxu0 0
  %120 = vmatprep.subr.bf16.mxu0 0
  %121 = vmatpush2.bf16.xpose.msra.mxu0 0
  %122 = vmatprep.subr.bf16.mxu0 0
  %123 = vmatpush2.bf16.xpose.msra.mxu0 0
  %124 = vmatprep.subr.bf16.mxu0 0
  %125 = vmatpush2.bf16.xpose.msra.mxu0 0
  %126 = vmatprep.subr.bf16.mxu0 0
  %127 = vmatpush2.bf16.xpose.msra.mxu0 0
  %128 = vmatprep.mubr.bf16.mxu0 0
  %129 = vmatmul.mubr.bf16.gmra.mxu0 %v91
  %v130 = vpop.f32.mrf.mxu0
  %v131 = vadd.f32 0.0, %v130
  %v132 = vpop.f32.mrf.mxu0
  %v133 = vpop.f32.mrf.mxu0
  %v134 = vpop.f32.mrf.mxu0
  %135 = vdwg.mxu0
  %v136 = vpack.c.bf16 %v131, %v131
  %v137 = vld [vmem:[%s4] sm:$0xf]
  %v138 = vld [vmem:[%s5] sm:$0xf]
  %v139 = vld [vmem:[%s5 + $0x4] sm:$0xf]
  %v142 = vunpack.c.l.b16 %v138
  %v143 = vunpack.c.l.b16 %v139
  %v144 = vpack.c.b16 %v143, %v142
  %146 = vmatprep.subr.bf16.mxu0 0
  %147 = vmatpush1.bf16.msra.mxu0 0
  %148 = vmatprep.subr.bf16.mxu0 0
  %149 = vmatpush1.bf16.msra.mxu0 0
  %150 = vmatprep.subr.bf16.mxu0 0
  %151 = vmatpush1.bf16.msra.mxu0 0
  %152 = vmatprep.subr.bf16.mxu0 0
  %153 = vmatpush1.bf16.msra.mxu0 0
  %154 = vmatprep.subr.bf16.mxu0 0
  %155 = vmatpush1.bf16.msra.mxu0 0
  %156 = vmatprep.subr.bf16.mxu0 0
  %157 = vmatpush1.bf16.msra.mxu0 0
  %158 = vmatprep.subr.bf16.mxu0 0
  %159 = vmatpush1.bf16.msra.mxu0 0
  %160 = vmatprep.subr.bf16.mxu0 0
  %161 = vmatpush1.bf16.msra.mxu0 %v144
  %162 = vmatprep.subr.bf16.mxu0 0
  %163 = vmatpush2.bf16.msra.mxu0 0
  %164 = vmatprep.subr.bf16.mxu0 0
  %165 = vmatpush2.bf16.msra.mxu0 0
  %166 = vmatprep.subr.bf16.mxu0 0
  %167 = vmatpush2.bf16.msra.mxu0 0
  %168 = vmatprep.subr.bf16.mxu0 0
  %169 = vmatpush2.bf16.msra.mxu0 0
  %170 = vmatprep.subr.bf16.mxu0 0
  %171 = vmatpush2.bf16.msra.mxu0 0
  %172 = vmatprep.subr.bf16.mxu0 0
  %173 = vmatpush2.bf16.msra.mxu0 0
  %174 = vmatprep.subr.bf16.mxu0 0
  %175 = vmatpush2.bf16.msra.mxu0 0
  %176 = vmatprep.subr.bf16.mxu0 0
  %177 = vmatpush2.bf16.msra.mxu0 0
  %178 = vmatprep.mubr.bf16.mxu0 0
  %179 = vmatmul.mubr.bf16.gmra.mxu0 %v91
  %v180 = vpop.f32.mrf.mxu0
  %v181 = vadd.f32 0.0, %v180
  %v182 = vpop.f32.mrf.mxu0
  %v183 = vpop.f32.mrf.mxu0
  %v184 = vpop.f32.mrf.mxu0
  %185 = vdwg.mxu0
  %vm186 = vcmask 64512
  %v188 = vsel %vm186, %v136, 0
  %vm190 = vcmask 1043456
  %v192 = vsel %vm190, %v137, 0
  %194 = vmatprep.subr.bf16.mxu0 0
  %195 = vmatpush1.bf16.msra.mxu0 0
  %196 = vmatprep.subr.bf16.mxu0 0
  %197 = vmatpush1.bf16.msra.mxu0 0
  %198 = vmatprep.subr.bf16.mxu0 0
  %199 = vmatpush1.bf16.msra.mxu0 0
  %200 = vmatprep.subr.bf16.mxu0 0
  %201 = vmatpush1.bf16.msra.mxu0 0
  %202 = vmatprep.subr.bf16.mxu0 0
  %203 = vmatpush1.bf16.msra.mxu0 0
  %204 = vmatprep.subr.bf16.mxu0 0
  %205 = vmatpush1.bf16.msra.mxu0 0
  %206 = vmatprep.subr.bf16.mxu0 0
  %207 = vmatpush1.bf16.msra.mxu0 0
  %208 = vmatprep.subr.bf16.mxu0 0
  %209 = vmatpush1.bf16.msra.mxu0 %v192
  %210 = vmatprep.subr.bf16.mxu0 0
  %211 = vmatpush2.bf16.msra.mxu0 0
  %212 = vmatprep.subr.bf16.mxu0 0
  %213 = vmatpush2.bf16.msra.mxu0 0
  %214 = vmatprep.subr.bf16.mxu0 0
  %215 = vmatpush2.bf16.msra.mxu0 0
  %216 = vmatprep.subr.bf16.mxu0 0
  %217 = vmatpush2.bf16.msra.mxu0 0
  %218 = vmatprep.subr.bf16.mxu0 0
  %219 = vmatpush2.bf16.msra.mxu0 0
  %220 = vmatprep.subr.bf16.mxu0 0
  %221 = vmatpush2.bf16.msra.mxu0 0
  %222 = vmatprep.subr.bf16.mxu0 0
  %223 = vmatpush2.bf16.msra.mxu0 0
  %224 = vmatprep.subr.bf16.mxu0 0
  %225 = vmatpush2.bf16.msra.mxu0 0
  %226 = vmatprep.mubr.bf16.mxu0 0
  %227 = vmatmul.mubr.bf16.gmra.mxu0 %v188
  %v228 = vpop.f32.mrf.mxu0
  %v229 = vadd.f32 %v181, %v228
  %v230 = vpop.f32.mrf.mxu0
  %v231 = vpop.f32.mrf.mxu0
  %v232 = vpop.f32.mrf.mxu0
  %233 = vdwg.mxu0
  %v234 = vpack.c.bf16 %v229, %v229
  %v235 = vld [vmem:[%s7] sm:$0xf]
  %v236 = vld [vmem:[%s7 + $0x4] sm:$0xf]
  %v237 = vld [vmem:[%s7 + $0x8] sm:$0xf]
  %v238 = vld [vmem:[%s7 + $0xc] sm:$0xf]
  %v239 = vld [vmem:[%s8] sm:$0x1]
  %v241 = vlaneseq
  %v242 = vshrl.u32 %v241, 7
  %v243 = vsub.s32 0, %v242
  %v244 = vrot.slane %v239, %v243
  %v250 = vunpack.c.l.b16 %v235
  %v251 = vunpack.c.l.b16 %v236
  %v252 = vunpack.c.l.b16 %v237
  %v253 = vunpack.c.l.b16 %v238
  %v254 = vpack.c.b16 %v251, %v250
  %v255 = vpack.c.b16 %v253, %v252
  %vm258 = vcmask 261120
  %v260 = vsel %vm258, %v234, 0
  %262 = vmatprep.subr.bf16.mxu0 0
  %263 = vmatpush1.bf16.msra.mxu0 0
  %264 = vmatprep.subr.bf16.mxu0 0
  %265 = vmatpush1.bf16.msra.mxu0 0
  %266 = vmatprep.subr.bf16.mxu0 0
  %267 = vmatpush1.bf16.msra.mxu0 0
  %268 = vmatprep.subr.bf16.mxu0 0
  %269 = vmatpush1.bf16.msra.mxu0 0
  %270 = vmatprep.subr.bf16.mxu0 0
  %271 = vmatpush1.bf16.msra.mxu0 0
  %272 = vmatprep.subr.bf16.mxu0 0
  %273 = vmatpush1.bf16.msra.mxu0 0
  %274 = vmatprep.subr.bf16.mxu0 0
  %275 = vmatpush1.bf16.msra.mxu0 %v255
  %276 = vmatprep.subr.bf16.mxu0 0
  %277 = vmatpush1.bf16.msra.mxu0 %v254
  %278 = vmatprep.subr.bf16.mxu0 0
  %279 = vmatpush2.bf16.msra.mxu0 0
  %280 = vmatprep.subr.bf16.mxu0 0
  %281 = vmatpush2.bf16.msra.mxu0 0
  %282 = vmatprep.subr.bf16.mxu0 0
  %283 = vmatpush2.bf16.msra.mxu0 0
  %284 = vmatprep.subr.bf16.mxu0 0
  %285 = vmatpush2.bf16.msra.mxu0 0
  %286 = vmatprep.subr.bf16.mxu0 0
  %287 = vmatpush2.bf16.msra.mxu0 0
  %288 = vmatprep.subr.bf16.mxu0 0
  %289 = vmatpush2.bf16.msra.mxu0 0
  %290 = vmatprep.subr.bf16.mxu0 0
  %291 = vmatpush2.bf16.msra.mxu0 0
  %292 = vmatprep.subr.bf16.mxu0 0
  %293 = vmatpush2.bf16.msra.mxu0 0
  %294 = vmatprep.mubr.bf16.mxu0 0
  %295 = vmatmul.mubr.bf16.gmra.mxu0 %v260
  %v296 = vpop.f32.mrf.mxu0
  %v297 = vadd.f32 %v244, %v296
  %v298 = vpop.f32.mrf.mxu0
  %v299 = vpop.f32.mrf.mxu0
  %v300 = vpop.f32.mrf.mxu0
  %301 = vdwg.mxu0
  %v302 = vmax.f32 %v297, 0.0
  %v303 = vpack.c.bf16 %v302, %v302
  %v304 = vld [vmem:[%s9] sm:$0xff]
  %v305 = vld [vmem:[%s9 + $0x8] sm:$0xff]
  %v306 = vld [vmem:[%s9 + $0x10] sm:$0xff]
  %v307 = vld [vmem:[%s9 + $0x18] sm:$0xff]
  %v308 = vld [vmem:[%s9 + $0x20] sm:$0xff]
  %v309 = vld [vmem:[%s9 + $0x28] sm:$0xff]
  %v310 = vld [vmem:[%s9 + $0x30] sm:$0xff]
  %v311 = vld [vmem:[%s9 + $0x38] sm:$0xff]
  %v312 = vld [vmem:[%s9 + $0x40] sm:$0xff]
  %v313 = vld [vmem:[%s9 + $0x48] sm:$0xff]
  %v314 = vld [vmem:[%s9 + $0x50] sm:$0xff]
  %v315 = vld [vmem:[%s9 + $0x58] sm:$0xff]
  %v316 = vld [vmem:[%s9 + $0x60] sm:$0xff]
  %v317 = vld [vmem:[%s9 + $0x68] sm:$0xff]
  %v318 = vld [vmem:[%s9 + $0x70] sm:$0xff]
  %v319 = vld [vmem:[%s9 + $0x78] sm:$0xff]
  %v320 = vld [vmem:[%s10] sm:$0x3]
  %v322 = vlaneseq
  %v323 = vshrl.u32 %v322, 7
  %v324 = vsub.s32 0, %v323
  %v325 = vrot.slane %v320, %v324
  %v326 = vlaneseq
  %v327 = vshrl.u32 %v326, 7
  %v328 = vsub.s32 1, %v327
  %v329 = vrot.slane %v320, %v328
  %v348 = vunpack.c.l.b16 %v304
  %v349 = vunpack.c.h.b16 %v304
  %v350 = vunpack.c.l.b16 %v305
  %v351 = vunpack.c.h.b16 %v305
  %v352 = vunpack.c.l.b16 %v306
  %v353 = vunpack.c.h.b16 %v306
  %v354 = vunpack.c.l.b16 %v307
  %v355 = vunpack.c.h.b16 %v307
  %v356 = vunpack.c.l.b16 %v308
  %v357 = vunpack.c.h.b16 %v308
  %v358 = vunpack.c.l.b16 %v309
  %v359 = vunpack.c.h.b16 %v309
  %v360 = vunpack.c.l.b16 %v310
  %v361 = vunpack.c.h.b16 %v310
  %v362 = vunpack.c.l.b16 %v311
  %v363 = vunpack.c.h.b16 %v311
  %v364 = vunpack.c.l.b16 %v312
  %v365 = vunpack.c.h.b16 %v312
  %v366 = vunpack.c.l.b16 %v313
  %v367 = vunpack.c.h.b16 %v313
  %v368 = vunpack.c.l.b16 %v314
  %v369 = vunpack.c.h.b16 %v314
  %v370 = vunpack.c.l.b16 %v315
  %v371 = vunpack.c.h.b16 %v315
  %v372 = vunpack.c.l.b16 %v316
  %v373 = vunpack.c.h.b16 %v316
  %v374 = vunpack.c.l.b16 %v317
  %v375 = vunpack.c.h.b16 %v317
  %v376 = vunpack.c.l.b16 %v318
  %v377 = vunpack.c.h.b16 %v318
  %v378 = vunpack.c.l.b16 %v319
  %v379 = vunpack.c.h.b16 %v319
  %v380 = vpack.c.b16 %v350, %v348
  %v381 = vpack.c.b16 %v351, %v349
  %v382 = vpack.c.b16 %v354, %v352
  %v383 = vpack.c.b16 %v355, %v353
  %v384 = vpack.c.b16 %v358, %v356
  %v385 = vpack.c.b16 %v359, %v357
  %v386 = vpack.c.b16 %v362, %v360
  %v387 = vpack.c.b16 %v363, %v361
  %v388 = vpack.c.b16 %v366, %v364
  %v389 = vpack.c.b16 %v367, %v365
  %v390 = vpack.c.b16 %v370, %v368
  %v391 = vpack.c.b16 %v371, %v369
  %v392 = vpack.c.b16 %v374, %v372
  %v393 = vpack.c.b16 %v375, %v373
  %v394 = vpack.c.b16 %v378, %v376
  %v395 = vpack.c.b16 %v379, %v377
  %412 = vmatprep.subr.bf16.mxu0 %v395
  %413 = vmatpush1.bf16.msra.mxu0 %v394
  %414 = vmatprep.subr.bf16.mxu0 %v393
  %415 = vmatpush1.bf16.msra.mxu0 %v392
  %416 = vmatprep.subr.bf16.mxu0 %v391
  %417 = vmatpush1.bf16.msra.mxu0 %v390
  %418 = vmatprep.subr.bf16.mxu0 %v389
  %419 = vmatpush1.bf16.msra.mxu0 %v388
  %420 = vmatprep.subr.bf16.mxu0 %v387
  %421 = vmatpush1.bf16.msra.mxu0 %v386
  %422 = vmatprep.subr.bf16.mxu0 %v385
  %423 = vmatpush1.bf16.msra.mxu0 %v384
  %424 = vmatprep.subr.bf16.mxu0 %v383
  %425 = vmatpush1.bf16.msra.mxu0 %v382
  %426 = vmatprep.subr.bf16.mxu0 %v381
  %427 = vmatpush1.bf16.msra.mxu0 %v380
  %428 = vmatprep.subr.bf16.mxu0 0
  %429 = vmatpush2.bf16.msra.mxu0 0
  %430 = vmatprep.subr.bf16.mxu0 0
  %431 = vmatpush2.bf16.msra.mxu0 0
  %432 = vmatprep.subr.bf16.mxu0 0
  %433 = vmatpush2.bf16.msra.mxu0 0
  %434 = vmatprep.subr.bf16.mxu0 0
  %435 = vmatpush2.bf16.msra.mxu0 0
  %436 = vmatprep.subr.bf16.mxu0 0
  %437 = vmatpush2.bf16.msra.mxu0 0
  %438 = vmatprep.subr.bf16.mxu0 0
  %439 = vmatpush2.bf16.msra.mxu0 0
  %440 = vmatprep.subr.bf16.mxu0 0
  %441 = vmatpush2.bf16.msra.mxu0 0
  %442 = vmatprep.subr.bf16.mxu0 0
  %443 = vmatpush2.bf16.msra.mxu0 0
  %444 = vmatprep.mubr.bf16.mxu0 0
  %445 = vmatmul.mubr.bf16.gmra.mxu0 %v303
  %v446 = vpop.f32.mrf.mxu0
  %v447 = vadd.f32 %v325, %v446
  %v448 = vpop.f32.mrf.mxu0
  %v449 = vadd.f32 %v329, %v448
  %v450 = vpop.f32.mrf.mxu0
  %v451 = vpop.f32.mrf.mxu0
  %452 = vdwg.mxu0
  %v453 = vpack.c.bf16 %v447, %v447
  %v454 = vpack.c.bf16 %v449, %v449
  %v456 = vsel %vm186, %v88, 0
  %v459 = vsel %vm190, %v453, 0
  %v462 = vsel %vm190, %v454, 0
  %464 = vmatprep.subr.bf16.mxu0 0
  %465 = vmatpush1.bf16.msra.mxu0 0
  %466 = vmatprep.subr.bf16.mxu0 0
  %467 = vmatpush1.bf16.msra.mxu0 0
  %468 = vmatprep.subr.bf16.mxu0 0
  %469 = vmatpush1.bf16.msra.mxu0 0
  %470 = vmatprep.subr.bf16.mxu0 0
  %471 = vmatpush1.bf16.msra.mxu0 0
  %472 = vmatprep.subr.bf16.mxu0 0
  %473 = vmatpush1.bf16.msra.mxu0 0
  %474 = vmatprep.subr.bf16.mxu0 0
  %475 = vmatpush1.bf16.msra.mxu0 0
  %476 = vmatprep.subr.bf16.mxu0 0
  %477 = vmatpush1.bf16.msra.mxu0 0
  %478 = vmatprep.subr.bf16.mxu0 %v462
  %479 = vmatpush1.bf16.msra.mxu0 %v459
  %480 = vmatprep.subr.bf16.mxu0 0
  %481 = vmatpush2.bf16.msra.mxu0 0
  %482 = vmatprep.subr.bf16.mxu0 0
  %483 = vmatpush2.bf16.msra.mxu0 0
  %484 = vmatprep.subr.bf16.mxu0 0
  %485 = vmatpush2.bf16.msra.mxu0 0
  %486 = vmatprep.subr.bf16.mxu0 0
  %487 = vmatpush2.bf16.msra.mxu0 0
  %488 = vmatprep.subr.bf16.mxu0 0
  %489 = vmatpush2.bf16.msra.mxu0 0
  %490 = vmatprep.subr.bf16.mxu0 0
  %491 = vmatpush2.bf16.msra.mxu0 0
  %492 = vmatprep.subr.bf16.mxu0 0
  %493 = vmatpush2.bf16.msra.mxu0 0
  %494 = vmatprep.subr.bf16.mxu0 0
  %495 = vmatpush2.bf16.msra.mxu0 0
  %496 = vmatprep.mubr.bf16.mxu0 0
  %497 = vmatmul.mubr.bf16.gmra.mxu0 %v456
  %v498 = vpop.f32.mrf.mxu0
  %v499 = vadd.f32 0.0, %v498
  %v500 = vpop.f32.mrf.mxu0
  %v501 = vadd.f32 0.0, %v500
  %v502 = vpop.f32.mrf.mxu0
  %v503 = vpop.f32.mrf.mxu0
  %504 = vdwg.mxu0
  %v505 = vld [vmem:[%s3] sm:$0xff]
  %507 = vset.pattern.permute.xlu0 0
  %508 = vperm.xlu0 %507, %v505
  %v509 = vpop.permute.xlu0 %508
  %v511 = vmul.f32 %v499, %v509
  %v512 = vmul.f32 %v501, %v509
  %v513 = vld [vmem:[%s6] sm:$0xf]
  %v514 = vld [vmem:[%s6 + $0x4] sm:$0xf]
  %v515 = vld [vmem:[%s11] sm:$0xf]
  %v516 = vld [vmem:[%s11 + $0x4] sm:$0xf]
  %v517 = vld [vmem:[%s11 + $0x8] sm:$0xf]
  %v518 = vld [vmem:[%s11 + $0xc] sm:$0xf]
  %v519 = vld [vmem:[%s11 + $0x10] sm:$0xf]
  %v520 = vld [vmem:[%s11 + $0x14] sm:$0xf]
  %v521 = vld [vmem:[%s11 + $0x18] sm:$0xf]
  %v522 = vld [vmem:[%s11 + $0x1c] sm:$0xf]
  %v523 = vld [vmem:[%s11 + $0x20] sm:$0xf]
  %v524 = vld [vmem:[%s11 + $0x24] sm:$0xf]
  %v525 = vld [vmem:[%s11 + $0x28] sm:$0xf]
  %v526 = vld [vmem:[%s11 + $0x2c] sm:$0xf]
  %v527 = vld [vmem:[%s11 + $0x30] sm:$0xf]
  %v528 = vld [vmem:[%s11 + $0x34] sm:$0x1]
  %v529 = vld [vmem:[%s12] sm:$0x1]
  %v531 = vlaneseq
  %v532 = vshrl.u32 %v531, 7
  %v533 = vsub.s32 0, %v532
  %v534 = vrot.slane %v529, %v533
  %v538 = vunpack.c.l.b16 %v513
  %v539 = vunpack.c.l.b16 %v514
  %v540 = vpack.c.b16 %v539, %v538
  %v555 = vunpack.c.l.b16 %v515
  %v556 = vunpack.c.l.b16 %v516
  %v557 = vunpack.c.l.b16 %v517
  %v558 = vunpack.c.l.b16 %v518
  %v559 = vunpack.c.l.b16 %v519
  %v560 = vunpack.c.l.b16 %v520
  %v561 = vunpack.c.l.b16 %v521
  %v562 = vunpack.c.l.b16 %v522
  %v563 = vunpack.c.l.b16 %v523
  %v564 = vunpack.c.l.b16 %v524
  %v565 = vunpack.c.l.b16 %v525
  %v566 = vunpack.c.l.b16 %v526
  %v567 = vunpack.c.l.b16 %v527
  %v568 = vunpack.c.l.b16 %v528
  %v569 = vpack.c.b16 %v556, %v555
  %v570 = vpack.c.b16 %v558, %v557
  %v571 = vpack.c.b16 %v560, %v559
  %v572 = vpack.c.b16 %v562, %v561
  %v573 = vpack.c.b16 %v564, %v563
  %v574 = vpack.c.b16 %v566, %v565
  %v575 = vpack.c.b16 %v568, %v567
  %vm582 = vcmask 859136
  %v584 = vsel %vm582, %v540, 0
  %vm586 = vcmask 1044480
  %v587 = vsel %vm190, 4294967295, 65535
  %v588 = vsel %vm586, %v587, 0
  %v590 = vand.u32 %v575, %v588
  %592 = vmatprep.subr.bf16.mxu0 0
  %593 = vmatpush1.bf16.msra.mxu0 0
  %594 = vmatprep.subr.bf16.mxu0 0
  %595 = vmatpush1.bf16.msra.mxu0 %v590
  %596 = vmatprep.subr.bf16.mxu0 0
  %597 = vmatpush1.bf16.msra.mxu0 %v574
  %598 = vmatprep.subr.bf16.mxu0 0
  %599 = vmatpush1.bf16.msra.mxu0 %v573
  %600 = vmatprep.subr.bf16.mxu0 0
  %601 = vmatpush1.bf16.msra.mxu0 %v572
  %602 = vmatprep.subr.bf16.mxu0 0
  %603 = vmatpush1.bf16.msra.mxu0 %v571
  %604 = vmatprep.subr.bf16.mxu0 0
  %605 = vmatpush1.bf16.msra.mxu0 %v570
  %606 = vmatprep.subr.bf16.mxu0 0
  %607 = vmatpush1.bf16.msra.mxu0 %v569
  %608 = vmatprep.subr.bf16.mxu0 0
  %609 = vmatpush2.bf16.msra.mxu0 0
  %610 = vmatprep.subr.bf16.mxu0 0
  %611 = vmatpush2.bf16.msra.mxu0 0
  %612 = vmatprep.subr.bf16.mxu0 0
  %613 = vmatpush2.bf16.msra.mxu0 0
  %614 = vmatprep.subr.bf16.mxu0 0
  %615 = vmatpush2.bf16.msra.mxu0 0
  %616 = vmatprep.subr.bf16.mxu0 0
  %617 = vmatpush2.bf16.msra.mxu0 0
  %618 = vmatprep.subr.bf16.mxu0 0
  %619 = vmatpush2.bf16.msra.mxu0 0
  %620 = vmatprep.subr.bf16.mxu0 0
  %621 = vmatpush2.bf16.msra.mxu0 0
  %622 = vmatprep.subr.bf16.mxu0 0
  %623 = vmatpush2.bf16.msra.mxu0 0
  %624 = vmatprep.mubr.bf16.mxu0 0
  %625 = vmatmul.mubr.bf16.gmra.mxu0 %v584
  %v626 = vpop.f32.mrf.mxu0
  %v627 = vadd.f32 %v534, %v626
  %v628 = vpop.f32.mrf.mxu0
  %v629 = vpop.f32.mrf.mxu0
  %v630 = vadd.f32 %v534, %v629
  %v631 = vpop.f32.mrf.mxu0
  %632 = vdwg.mxu0
  %v633 = vmax.f32 %v627, 0.0
  %v634 = vmax.f32 %v630, 0.0
  %v635 = vmax.f32 %v633, %v634
  %v636 = vpack.c.bf16 %v635, %v635
  %v637 = vld [vmem:[%s13] sm:$0xf]
  %v638 = vld [vmem:[%s13 + $0x4] sm:$0xf]
  %v639 = vld [vmem:[%s13 + $0x8] sm:$0xf]
  %v640 = vld [vmem:[%s13 + $0xc] sm:$0xf]
  %v641 = vld [vmem:[%s13 + $0x10] sm:$0xf]
  %v642 = vld [vmem:[%s13 + $0x14] sm:$0xf]
  %v643 = vld [vmem:[%s13 + $0x18] sm:$0xf]
  %v644 = vld [vmem:[%s13 + $0x1c] sm:$0xf]
  %v645 = vld [vmem:[%s13 + $0x20] sm:$0xf]
  %v646 = vld [vmem:[%s13 + $0x24] sm:$0xf]
  %v647 = vld [vmem:[%s13 + $0x28] sm:$0xf]
  %v648 = vld [vmem:[%s13 + $0x2c] sm:$0xf]
  %v649 = vld [vmem:[%s13 + $0x30] sm:$0xf]
  %v650 = vld [vmem:[%s13 + $0x34] sm:$0xf]
  %v651 = vld [vmem:[%s13 + $0x38] sm:$0xf]
  %v652 = vld [vmem:[%s13 + $0x3c] sm:$0xf]
  %v653 = vld [vmem:[%s14] sm:$0x1]
  %v655 = vlaneseq
  %v656 = vshrl.u32 %v655, 7
  %v657 = vsub.s32 0, %v656
  %v658 = vrot.slane %v653, %v657
  %v676 = vunpack.c.l.b16 %v637
  %v677 = vunpack.c.l.b16 %v638
  %v678 = vunpack.c.l.b16 %v639
  %v679 = vunpack.c.l.b16 %v640
  %v680 = vunpack.c.l.b16 %v641
  %v681 = vunpack.c.l.b16 %v642
  %v682 = vunpack.c.l.b16 %v643
  %v683 = vunpack.c.l.b16 %v644
  %v684 = vunpack.c.l.b16 %v645
  %v685 = vunpack.c.l.b16 %v646
  %v686 = vunpack.c.l.b16 %v647
  %v687 = vunpack.c.l.b16 %v648
  %v688 = vunpack.c.l.b16 %v649
  %v689 = vunpack.c.l.b16 %v650
  %v690 = vunpack.c.l.b16 %v651
  %v691 = vunpack.c.l.b16 %v652
  %v692 = vpack.c.b16 %v677, %v676
  %v693 = vpack.c.b16 %v679, %v678
  %v694 = vpack.c.b16 %v681, %v680
  %v695 = vpack.c.b16 %v683, %v682
  %v696 = vpack.c.b16 %v685, %v684
  %v697 = vpack.c.b16 %v687, %v686
  %v698 = vpack.c.b16 %v689, %v688
  %v699 = vpack.c.b16 %v691, %v690
  %708 = vmatprep.subr.bf16.mxu0 0
  %709 = vmatpush1.bf16.msra.mxu0 %v699
  %710 = vmatprep.subr.bf16.mxu0 0
  %711 = vmatpush1.bf16.msra.mxu0 %v698
  %712 = vmatprep.subr.bf16.mxu0 0
  %713 = vmatpush1.bf16.msra.mxu0 %v697
  %714 = vmatprep.subr.bf16.mxu0 0
  %715 = vmatpush1.bf16.msra.mxu0 %v696
  %716 = vmatprep.subr.bf16.mxu0 0
  %717 = vmatpush1.bf16.msra.mxu0 %v695
  %718 = vmatprep.subr.bf16.mxu0 0
  %719 = vmatpush1.bf16.msra.mxu0 %v694
  %720 = vmatprep.subr.bf16.mxu0 0
  %721 = vmatpush1.bf16.msra.mxu0 %v693
  %722 = vmatprep.subr.bf16.mxu0 0
  %723 = vmatpush1.bf16.msra.mxu0 %v692
  %724 = vmatprep.subr.bf16.mxu0 0
  %725 = vmatpush2.bf16.msra.mxu0 0
  %726 = vmatprep.subr.bf16.mxu0 0
  %727 = vmatpush2.bf16.msra.mxu0 0
  %728 = vmatprep.subr.bf16.mxu0 0
  %729 = vmatpush2.bf16.msra.mxu0 0
  %730 = vmatprep.subr.bf16.mxu0 0
  %731 = vmatpush2.bf16.msra.mxu0 0
  %732 = vmatprep.subr.bf16.mxu0 0
  %733 = vmatpush2.bf16.msra.mxu0 0
  %734 = vmatprep.subr.bf16.mxu0 0
  %735 = vmatpush2.bf16.msra.mxu0 0
  %736 = vmatprep.subr.bf16.mxu0 0
  %737 = vmatpush2.bf16.msra.mxu0 0
  %738 = vmatprep.subr.bf16.mxu0 0
  %739 = vmatpush2.bf16.msra.mxu0 0
  %740 = vmatprep.mubr.bf16.mxu0 0
  %741 = vmatmul.mubr.bf16.gmra.mxu0 %v636
  %v742 = vpop.f32.mrf.mxu0
  %v743 = vadd.f32 %v658, %v742
  %v744 = vpop.f32.mrf.mxu0
  %v745 = vpop.f32.mrf.mxu0
  %v746 = vpop.f32.mrf.mxu0
  %747 = vdwg.mxu0
  %v748 = vpack.c.bf16 %v511, %v511
  %v749 = vpack.c.bf16 %v512, %v512
  %v750 = vld [vmem:[%s15] sm:$0xf]
  %v751 = vld [vmem:[%s15 + $0x4] sm:$0xf]
  %v752 = vld [vmem:[%s15 + $0x8] sm:$0xf]
  %v753 = vld [vmem:[%s15 + $0xc] sm:$0xf]
  %v754 = vld [vmem:[%s15 + $0x10] sm:$0xf]
  %v755 = vld [vmem:[%s15 + $0x14] sm:$0xf]
  %v756 = vld [vmem:[%s15 + $0x18] sm:$0xf]
  %v757 = vld [vmem:[%s15 + $0x1c] sm:$0xf]
  %v758 = vld [vmem:[%s15 + $0x20] sm:$0xf]
  %v759 = vld [vmem:[%s15 + $0x24] sm:$0xf]
  %v760 = vld [vmem:[%s15 + $0x28] sm:$0xf]
  %v761 = vld [vmem:[%s15 + $0x2c] sm:$0xf]
  %v762 = vld [vmem:[%s15 + $0x30] sm:$0xf]
  %v763 = vld [vmem:[%s15 + $0x34] sm:$0xf]
  %v764 = vld [vmem:[%s15 + $0x38] sm:$0xf]
  %v765 = vld [vmem:[%s15 + $0x3c] sm:$0xf]
  %v766 = vld [vmem:[%s15 + $0x40] sm:$0xf]
  %v767 = vld [vmem:[%s15 + $0x44] sm:$0xf]
  %v768 = vld [vmem:[%s15 + $0x48] sm:$0xf]
  %v769 = vld [vmem:[%s15 + $0x4c] sm:$0xf]
  %v770 = vld [vmem:[%s15 + $0x50] sm:$0xf]
  %v771 = vld [vmem:[%s15 + $0x54] sm:$0xf]
  %v772 = vld [vmem:[%s15 + $0x58] sm:$0xf]
  %v773 = vld [vmem:[%s15 + $0x5c] sm:$0xf]
  %v774 = vld [vmem:[%s15 + $0x60] sm:$0xf]
  %v775 = vld [vmem:[%s15 + $0x64] sm:$0xf]
  %v776 = vld [vmem:[%s15 + $0x68] sm:$0xf]
  %v777 = vld [vmem:[%s15 + $0x6c] sm:$0xf]
  %v778 = vld [vmem:[%s15 + $0x70] sm:$0xf]
  %v779 = vld [vmem:[%s15 + $0x74] sm:$0xf]
  %v780 = vld [vmem:[%s15 + $0x78] sm:$0xf]
  %v781 = vld [vmem:[%s15 + $0x7c] sm:$0xf]
  %v782 = vpack.c.bf16 %v743, %v743
  %v783 = vld [vmem:[%s16] sm:$0xf]
  %v784 = vld [vmem:[%s16 + $0x4] sm:$0xf]
  %v785 = vld [vmem:[%s16 + $0x8] sm:$0xf]
  %v786 = vld [vmem:[%s16 + $0xc] sm:$0xf]
  %v787 = vld [vmem:[%s16 + $0x10] sm:$0xf]
  %v788 = vld [vmem:[%s16 + $0x14] sm:$0xf]
  %v789 = vld [vmem:[%s16 + $0x18] sm:$0xf]
  %v790 = vld [vmem:[%s16 + $0x1c] sm:$0xf]
  %v791 = vld [vmem:[%s16 + $0x20] sm:$0xf]
  %v792 = vld [vmem:[%s16 + $0x24] sm:$0xf]
  %v793 = vld [vmem:[%s16 + $0x28] sm:$0xf]
  %v794 = vld [vmem:[%s16 + $0x2c] sm:$0xf]
  %v795 = vld [vmem:[%s16 + $0x30] sm:$0xf]
  %v796 = vld [vmem:[%s16 + $0x34] sm:$0xf]
  %v797 = vld [vmem:[%s16 + $0x38] sm:$0xf]
  %v798 = vld [vmem:[%s16 + $0x3c] sm:$0xf]
  %v815 = vunpack.c.l.b16 %v783
  %v816 = vunpack.c.l.b16 %v784
  %v817 = vunpack.c.l.b16 %v785
  %v818 = vunpack.c.l.b16 %v786
  %v819 = vunpack.c.l.b16 %v787
  %v820 = vunpack.c.l.b16 %v788
  %v821 = vunpack.c.l.b16 %v789
  %v822 = vunpack.c.l.b16 %v790
  %v823 = vunpack.c.l.b16 %v791
  %v824 = vunpack.c.l.b16 %v792
  %v825 = vunpack.c.l.b16 %v793
  %v826 = vunpack.c.l.b16 %v794
  %v827 = vunpack.c.l.b16 %v795
  %v828 = vunpack.c.l.b16 %v796
  %v829 = vunpack.c.l.b16 %v797
  %v830 = vunpack.c.l.b16 %v798
  %v831 = vpack.c.b16 %v816, %v815
  %v832 = vpack.c.b16 %v818, %v817
  %v833 = vpack.c.b16 %v820, %v819
  %v834 = vpack.c.b16 %v822, %v821
  %v835 = vpack.c.b16 %v824, %v823
  %v836 = vpack.c.b16 %v826, %v825
  %v837 = vpack.c.b16 %v828, %v827
  %v838 = vpack.c.b16 %v830, %v829
  %847 = vmatprep.subr.bf16.mxu0 0
  %848 = vmatpush1.bf16.msra.mxu0 %v838
  %849 = vmatprep.subr.bf16.mxu0 0
  %850 = vmatpush1.bf16.msra.mxu0 %v837
  %851 = vmatprep.subr.bf16.mxu0 0
  %852 = vmatpush1.bf16.msra.mxu0 %v836
  %853 = vmatprep.subr.bf16.mxu0 0
  %854 = vmatpush1.bf16.msra.mxu0 %v835
  %855 = vmatprep.subr.bf16.mxu0 0
  %856 = vmatpush1.bf16.msra.mxu0 %v834
  %857 = vmatprep.subr.bf16.mxu0 0
  %858 = vmatpush1.bf16.msra.mxu0 %v833
  %859 = vmatprep.subr.bf16.mxu0 0
  %860 = vmatpush1.bf16.msra.mxu0 %v832
  %861 = vmatprep.subr.bf16.mxu0 0
  %862 = vmatpush1.bf16.msra.mxu0 %v831
  %863 = vmatprep.subr.bf16.mxu0 0
  %864 = vmatpush2.bf16.msra.mxu0 0
  %865 = vmatprep.subr.bf16.mxu0 0
  %866 = vmatpush2.bf16.msra.mxu0 0
  %867 = vmatprep.subr.bf16.mxu0 0
  %868 = vmatpush2.bf16.msra.mxu0 0
  %869 = vmatprep.subr.bf16.mxu0 0
  %870 = vmatpush2.bf16.msra.mxu0 0
  %871 = vmatprep.subr.bf16.mxu0 0
  %872 = vmatpush2.bf16.msra.mxu0 0
  %873 = vmatprep.subr.bf16.mxu0 0
  %874 = vmatpush2.bf16.msra.mxu0 0
  %875 = vmatprep.subr.bf16.mxu0 0
  %876 = vmatpush2.bf16.msra.mxu0 0
  %877 = vmatprep.subr.bf16.mxu0 0
  %878 = vmatpush2.bf16.msra.mxu0 0
  %879 = vmatprep.mubr.bf16.mxu0 0
  %880 = vmatmul.mubr.bf16.gmra.mxu0 %v782
  %v881 = vpop.f32.mrf.mxu0
  %v882 = vadd.f32 0.0, %v881
  %v883 = vpop.f32.mrf.mxu0
  %v884 = vpop.f32.mrf.mxu0
  %v885 = vpop.f32.mrf.mxu0
  %886 = vdwg.mxu0
  %v919 = vunpack.c.l.b16 %v750
  %v920 = vunpack.c.l.b16 %v751
  %v921 = vunpack.c.l.b16 %v752
  %v922 = vunpack.c.l.b16 %v753
  %v923 = vunpack.c.l.b16 %v754
  %v924 = vunpack.c.l.b16 %v755
  %v925 = vunpack.c.l.b16 %v756
  %v926 = vunpack.c.l.b16 %v757
  %v927 = vunpack.c.l.b16 %v758
  %v928 = vunpack.c.l.b16 %v759
  %v929 = vunpack.c.l.b16 %v760
  %v930 = vunpack.c.l.b16 %v761
  %v931 = vunpack.c.l.b16 %v762
  %v932 = vunpack.c.l.b16 %v763
  %v933 = vunpack.c.l.b16 %v764
  %v934 = vunpack.c.l.b16 %v765
  %v935 = vunpack.c.l.b16 %v766
  %v936 = vunpack.c.l.b16 %v767
  %v937 = vunpack.c.l.b16 %v768
  %v938 = vunpack.c.l.b16 %v769
  %v939 = vunpack.c.l.b16 %v770
  %v940 = vunpack.c.l.b16 %v771
  %v941 = vunpack.c.l.b16 %v772
  %v942 = vunpack.c.l.b16 %v773
  %v943 = vunpack.c.l.b16 %v774
  %v944 = vunpack.c.l.b16 %v775
  %v945 = vunpack.c.l.b16 %v776
  %v946 = vunpack.c.l.b16 %v777
  %v947 = vunpack.c.l.b16 %v778
  %v948 = vunpack.c.l.b16 %v779
  %v949 = vunpack.c.l.b16 %v780
  %v950 = vunpack.c.l.b16 %v781
  %v951 = vpack.c.b16 %v920, %v919
  %v952 = vpack.c.b16 %v922, %v921
  %v953 = vpack.c.b16 %v924, %v923
  %v954 = vpack.c.b16 %v926, %v925
  %v955 = vpack.c.b16 %v928, %v927
  %v956 = vpack.c.b16 %v930, %v929
  %v957 = vpack.c.b16 %v932, %v931
  %v958 = vpack.c.b16 %v934, %v933
  %v959 = vpack.c.b16 %v936, %v935
  %v960 = vpack.c.b16 %v938, %v937
  %v961 = vpack.c.b16 %v940, %v939
  %v962 = vpack.c.b16 %v942, %v941
  %v963 = vpack.c.b16 %v944, %v943
  %v964 = vpack.c.b16 %v946, %v945
  %v965 = vpack.c.b16 %v948, %v947
  %v966 = vpack.c.b16 %v950, %v949
  %983 = vmatprep.subr.bf16.mxu0 0
  %984 = vmatpush1.bf16.msra.mxu0 %v958
  %985 = vmatprep.subr.bf16.mxu0 0
  %986 = vmatpush1.bf16.msra.mxu0 %v957
  %987 = vmatprep.subr.bf16.mxu0 0
  %988 = vmatpush1.bf16.msra.mxu0 %v956
  %989 = vmatprep.subr.bf16.mxu0 0
  %990 = vmatpush1.bf16.msra.mxu0 %v955
  %991 = vmatprep.subr.bf16.mxu0 0
  %992 = vmatpush1.bf16.msra.mxu0 %v954
  %993 = vmatprep.subr.bf16.mxu0 0
  %994 = vmatpush1.bf16.msra.mxu0 %v953
  %995 = vmatprep.subr.bf16.mxu0 0
  %996 = vmatpush1.bf16.msra.mxu0 %v952
  %997 = vmatprep.subr.bf16.mxu0 0
  %998 = vmatpush1.bf16.msra.mxu0 %v951
  %999 = vmatprep.subr.bf16.mxu0 0
  %1000 = vmatpush2.bf16.msra.mxu0 %v966
  %1001 = vmatprep.subr.bf16.mxu0 0
  %1002 = vmatpush2.bf16.msra.mxu0 %v965
  %1003 = vmatprep.subr.bf16.mxu0 0
  %1004 = vmatpush2.bf16.msra.mxu0 %v964
  %1005 = vmatprep.subr.bf16.mxu0 0
  %1006 = vmatpush2.bf16.msra.mxu0 %v963
  %1007 = vmatprep.subr.bf16.mxu0 0
  %1008 = vmatpush2.bf16.msra.mxu0 %v962
  %1009 = vmatprep.subr.bf16.mxu0 0
  %1010 = vmatpush2.bf16.msra.mxu0 %v961
  %1011 = vmatprep.subr.bf16.mxu0 0
  %1012 = vmatpush2.bf16.msra.mxu0 %v960
  %1013 = vmatprep.subr.bf16.mxu0 0
  %1014 = vmatpush2.bf16.msra.mxu0 %v959
  %1015 = vmatprep.mubr.bf16.mxu0 %v749
  %1016 = vmatmul.mubr.bf16.gmra.mxu0 %v748
  %v1017 = vpop.f32.mrf.mxu0
  %v1018 = vadd.f32 %v882, %v1017
  %v1019 = vpop.f32.mrf.mxu0
  %v1020 = vpop.f32.mrf.mxu0
  %v1021 = vpop.f32.mrf.mxu0
  %1022 = vdwg.mxu0
  %v1023 = vld [vmem:[%s17] sm:$0x1]
  %v1025 = vlaneseq
  %v1026 = vshrl.u32 %v1025, 7
  %v1027 = vsub.s32 0, %v1026
  %v1028 = vrot.slane %v1023, %v1027
  %v1030 = vadd.f32 %v1018, %v1028
  %v1031 = vxor.u32 %v1030, 2147483648
  %v1032 = vmul.f32 %v1031, 1.442695
  %v1033 = vpow.pop %v1032
  %v1034 = vadd.f32 %v1033, 1.0
  %v1035 = vrcp.pop %v1034
  %v1036 = vmul.f32 1.0, %v1035
  %1037 = vst [vmem:[%s18] sm:$0xff] %v1036
  // Predicated region
  $region74: #{dti_model.1} parent=0 // pred_check
    _
  $region75: #{dti_model.1} parent=0 // pred_check_branch
    %1039 = sbr.rel (0) target = $region77
  $region76: #{dti_model.1} parent=0 // pred_region
    _
  $region77: #{dti_model.1} parent=0 // pred_fallthru
    _
  // Predicated region
  $region78: #{dti_model.1} parent=0 // pred_check
    _
  $region79: #{dti_model.1} parent=0 // pred_check_branch
    %1041 = sbr.rel (0) target = $region81
  $region80: #{dti_model.1} parent=0 // pred_region
    _
  $region81: #{dti_model.1} parent=0 // pred_fallthru
    _

</llo_original>
